<compile_context>
chip_gen: v7x
topology: tpu7x:2x2x1
jax: 0.10.0
libtpu: 0.0.40
codegen_flags: <defaults>
</compile_context>

<pallas_src>
import functools

import jax
import jax.numpy as jnp
from jax.experimental import pallas as pl
from jax.experimental.pallas import tpu as pltpu


def _round_up(a, b):
    return ((a + b - 1) // b) * b


def _gnn_kernel_fused(h_ref, x_ref, w_ref, o_ref, acc_ref):
    """acc += H_tile @ x_ktile over k; at the last k step apply W and store."""
    k = pl.program_id(1)

    @pl.when(k == 0)
    def _():
        acc_ref[...] = jnp.zeros_like(acc_ref)

    acc_ref[...] += jnp.dot(h_ref[...], x_ref[...],
                            preferred_element_type=jnp.float32)

    @pl.when(k == pl.num_programs(1) - 1)
    def _():
        o_ref[...] = jnp.dot(acc_ref[...], w_ref[...],
                             preferred_element_type=jnp.float32).astype(o_ref.dtype)


def _gnn_kernel_premul(h_ref, xw_ref, o_ref, acc_ref):
    """W already folded into xW in the wrapper; accumulate H_tile @ xW_ktile."""
    k = pl.program_id(1)

    @pl.when(k == 0)
    def _():
        acc_ref[...] = jnp.zeros_like(acc_ref)

    acc_ref[...] += jnp.dot(h_ref[...], xw_ref[...],
                            preferred_element_type=jnp.float32)

    @pl.when(k == pl.num_programs(1) - 1)
    def _():
        o_ref[...] = acc_ref[...].astype(o_ref.dtype)


@functools.partial(jax.jit, static_argnames=("tm", "tk"))
def gnn_step(H, x, W, *, tm=256, tk=512):
    """out = H @ x @ W  with H:(N,N), x:(N,Fin), W:(Fin,Fout) -> (N,Fout) f32."""
    N, N2 = H.shape
    assert N == N2, "H must be square"
    xN, Fin = x.shape
    assert xN == N
    Fin_w, Fout = W.shape
    assert Fin_w == Fin

    # Carry the narrower feature width through the O(N^2) contraction.
    apply_w_in_kernel = Fin <= Fout

    Fout_pad = _round_up(Fout, 128)        # lane-dense output stores

    # (8,128)-aligned tiles, clamped for small problems (single grid step).
    tm = min(tm, _round_up(N, 128))
    tk = min(tk, _round_up(N, 128))
    Nr = _round_up(N, tm)                  # padded output rows
    Nk = _round_up(N, tk)                  # padded contraction dim

    # bf16 operands for the big matmul: halves HBM traffic for the dominant
    # H stream and runs at native MXU rate; accumulation stays f32.
    Hb = H.astype(jnp.bfloat16)
    if (Nr, Nk) != (N, N):
        Hb = jnp.pad(Hb, ((0, Nr - N), (0, Nk - N)))

    if apply_w_in_kernel:
        carried = Fin
        Bb = x.astype(jnp.bfloat16)
        if Nk != N:
            Bb = jnp.pad(Bb, ((0, Nk - N), (0, 0)))
        Wp = W.astype(jnp.float32)
        if Fout_pad != Fout:
            Wp = jnp.pad(Wp, ((0, 0), (0, Fout_pad - Fout)))
        operands = (Hb, Bb, Wp)
        kernel = _gnn_kernel_fused
        in_specs = [
            pl.BlockSpec((tm, tk), lambda i, k: (i, k)),          # H tile
            pl.BlockSpec((tk, Fin), lambda i, k: (k, 0)),         # x k-slab
            pl.BlockSpec((Fin, Fout_pad), lambda i, k: (0, 0)),   # W (resident)
        ]
        flops = 2 * Nr * Nk * Fin + 2 * Nr * Fin * Fout_pad
        bytes_accessed = (Hb.size * 2 + Bb.size * 2 + Wp.size * 4
                          + Nr * Fout_pad * 4)
    else:
        # Fout < Fin: fold W in once (cheap O(N*Fin*Fout)) and carry width Fout.
        carried = Fout_pad
        xw = jnp.dot(x.astype(jnp.float32), W.astype(jnp.float32),
                     preferred_element_type=jnp.float32)
        if Fout_pad != Fout:
            xw = jnp.pad(xw, ((0, 0), (0, Fout_pad - Fout)))
        if Nk != N:
            xw = jnp.pad(xw, ((0, Nk - N), (0, 0)))
        Bb = xw.astype(jnp.bfloat16)
        operands = (Hb, Bb)
        kernel = _gnn_kernel_premul
        in_specs = [
            pl.BlockSpec((tm, tk), lambda i, k: (i, k)),          # H tile
            pl.BlockSpec((tk, Fout_pad), lambda i, k: (k, 0)),    # (x @ W) k-slab
        ]
        flops = 2 * Nr * Nk * Fout_pad
        bytes_accessed = Hb.size * 2 + Bb.size * 2 + Nr * Fout_pad * 4

    grid = (Nr // tm, Nk // tk)

    out_padded = pl.pallas_call(
        kernel,
        out_shape=jax.ShapeDtypeStruct((Nr, Fout_pad), jnp.float32),
        grid_spec=pltpu.PrefetchScalarGridSpec(
            num_scalar_prefetch=0,
            grid=grid,
            in_specs=in_specs,
            out_specs=pl.BlockSpec((tm, Fout_pad), lambda i, k: (i, 0)),
            scratch_shapes=[pltpu.VMEM((tm, carried), jnp.float32)],
        ),
        compiler_params=pltpu.CompilerParams(
            dimension_semantics=("parallel", "arbitrary"),
            vmem_limit_bytes=64 * 1024 * 1024,
        ),
        cost_estimate=pl.CostEstimate(
            flops=flops, transcendentals=0, bytes_accessed=bytes_accessed),
    )(*operands)

    return out_padded[:N, :Fout]


if __name__ == "__main__":
    key = jax.random.PRNGKey(0)
    k_h, k_x, k_w, k_h2, k_x2, k_w2 = jax.random.split(key, 6)

    # ---- Test 1: module shapes (Fin <= Fout -> fused-W kernel path) --------
    N, Fin, Fout = 128, 32, 64
    H = jax.random.normal(k_h, (N, N), dtype=jnp.float32)
    stdv = 1.0 / (Fin * Fout) ** 0.5
    W = jax.random.uniform(k_w, (Fin, Fout), dtype=jnp.float32,
                           minval=-stdv, maxval=stdv)
    x = jax.random.normal(k_x, (N, Fin), dtype=jnp.float32)

    out = jax.block_until_ready(gnn_step(H, x, W))
    assert out.shape == (N, Fout)

    # Tight check vs a bf16-consistent reference (same operand rounding).
    ref_bf16 = (H.astype(jnp.bfloat16).astype(jnp.float32)
                @ x.astype(jnp.bfloat16).astype(jnp.float32)) @ W
    assert jnp.allclose(out, ref_bf16, rtol=1e-3, atol=1e-3), \
        "mismatch vs bf16-consistent reference"
    # Loose check vs the full-f32 PyTorch-equivalent reference.
    ref_f32 = (H @ x) @ W
    assert jnp.allclose(out, ref_f32, rtol=5e-2, atol=5e-2), \
        "mismatch vs f32 reference"

    # ---- Test 2: ragged N and Fout < Fin (premultiplied-W kernel path) -----
    N2_, Fin2, Fout2 = 96, 64, 32
    H2 = jax.random.normal(k_h2, (N2_, N2_), dtype=jnp.float32)
    stdv2 = 1.0 / (Fin2 * Fout2) ** 0.5
    W2 = jax.random.uniform(k_w2, (Fin2, Fout2), dtype=jnp.float32,
                            minval=-stdv2, maxval=stdv2)
    x2 = jax.random.normal(k_x2, (N2_, Fin2), dtype=jnp.float32)

    out2 = jax.block_until_ready(gnn_step(H2, x2, W2))
    assert out2.shape == (N2_, Fout2)
    ref2 = (H2 @ x2) @ W2
    assert jnp.allclose(out2, ref2, rtol=5e-2, atol=5e-2), \
        "mismatch vs f32 reference (premul path)"

    print("KERNEL_OK")
</pallas_src>

<mosaic_0001>
module attributes {stable_mosaic.version = 11 : i64} {
  func.func @_gnn_kernel_fused(%arg0: i32, %arg1: i32, %arg2: memref<128x128xbf16, #tpu.memory_space<vmem>>, %arg3: memref<128x32xbf16, #tpu.memory_space<vmem>>, %arg4: memref<32x128xf32, #tpu.memory_space<vmem>>, %arg5: memref<128x128xf32, #tpu.memory_space<vmem>>, %arg6: memref<128x32xf32, #tpu.memory_space<vmem>>) attributes {dimension_semantics = [#tpu.dimension_semantics<parallel>, #tpu.dimension_semantics<arbitrary>], iteration_bounds = array<i64: 1, 1>, scalar_prefetch = 0 : i64, scratch_operands = 1 : i64, tpu.core_type = #tpu.core_type<tc>, window_params = [{transform_indices = @transform_0, window_bounds = array<i64: 128, 128>}, {transform_indices = @transform_1, window_bounds = array<i64: 128, 32>}, {pipeline_mode = #tpu.pipeline_mode<synchronous>, transform_indices = @transform_2, window_bounds = array<i64: 32, 128>}, {transform_indices = @transform_3, window_bounds = array<i64: 128, 128>}]} {
    %c0_i32 = arith.constant 0 : i32
    %0 = arith.cmpi eq, %arg1, %c0_i32 : i32
    %1 = arith.extui %0 : i1 to i32
    %c0_i32_0 = arith.constant 0 : i32
    %2 = arith.cmpi ne, %1, %c0_i32_0 : i32
    scf.if %2 {
      %cst_10 = arith.constant 0.000000e+00 : f32
      %12 = vector.broadcast %cst_10 : f32 to vector<128x32xf32>
      %c0_11 = arith.constant 0 : index
      %c0_12 = arith.constant 0 : index
      %13 = vector.load %arg6[%c0_11, %c0_12] : memref<128x32xf32, #tpu.memory_space<vmem>>, vector<128x32xf32>
      tpu.vector_store %arg6[%c0_11, %c0_12], %12 {strides = array<i32>} : memref<128x32xf32, #tpu.memory_space<vmem>>, vector<128x32xf32>,
    } else {
    }
    %c0 = arith.constant 0 : index
    %c0_1 = arith.constant 0 : index
    %3 = vector.load %arg6[%c0, %c0_1] : memref<128x32xf32, #tpu.memory_space<vmem>>, vector<128x32xf32>
    %c0_2 = arith.constant 0 : index
    %c0_3 = arith.constant 0 : index
    %4 = vector.load %arg2[%c0_2, %c0_3] : memref<128x128xbf16, #tpu.memory_space<vmem>>, vector<128x128xbf16>
    %c0_4 = arith.constant 0 : index
    %c0_5 = arith.constant 0 : index
    %5 = vector.load %arg3[%c0_4, %c0_5] : memref<128x32xbf16, #tpu.memory_space<vmem>>, vector<128x32xbf16>
    %cst = arith.constant dense<0.000000e+00> : vector<128x32xf32>
    %6 = tpu.matmul %4, %5, %cst {dimension_numbers = #tpu.dot_dimension_numbers<[1], [0], [0], [1], [0, 0, 1, 1], [], []>} : vector<128x128xbf16>, vector<128x32xbf16>, vector<128x32xf32> -> vector<128x32xf32>
    %7 = arith.addf %3, %6 : vector<128x32xf32>
    %c0_6 = arith.constant 0 : index
    %c0_7 = arith.constant 0 : index
    %8 = vector.load %arg6[%c0_6, %c0_7] : memref<128x32xf32, #tpu.memory_space<vmem>>, vector<128x32xf32>
    tpu.vector_store %arg6[%c0_6, %c0_7], %7 {strides = array<i32>} : memref<128x32xf32, #tpu.memory_space<vmem>>, vector<128x32xf32>,
    %c0_i32_8 = arith.constant 0 : i32
    %9 = arith.cmpi eq, %arg1, %c0_i32_8 : i32
    %10 = arith.extui %9 : i1 to i32
    %c0_i32_9 = arith.constant 0 : i32
    %11 = arith.cmpi ne, %10, %c0_i32_9 : i32
    scf.if %11 {
      %c0_10 = arith.constant 0 : index
      %c0_11 = arith.constant 0 : index
      %12 = vector.load %arg6[%c0_10, %c0_11] : memref<128x32xf32, #tpu.memory_space<vmem>>, vector<128x32xf32>
      %c0_12 = arith.constant 0 : index
      %c0_13 = arith.constant 0 : index
      %13 = vector.load %arg4[%c0_12, %c0_13] : memref<32x128xf32, #tpu.memory_space<vmem>>, vector<32x128xf32>
      %cst_14 = arith.constant dense<0.000000e+00> : vector<128x128xf32>
      %14 = tpu.matmul %12, %13, %cst_14 {dimension_numbers = #tpu.dot_dimension_numbers<[1], [0], [0], [1], [0, 0, 1, 1], [], []>} : vector<128x32xf32>, vector<32x128xf32>, vector<128x128xf32> -> vector<128x128xf32>
      %c0_15 = arith.constant 0 : index
      %c0_16 = arith.constant 0 : index
      %15 = vector.load %arg5[%c0_15, %c0_16] : memref<128x128xf32, #tpu.memory_space<vmem>>, vector<128x128xf32>
      tpu.vector_store %arg5[%c0_15, %c0_16], %14 {strides = array<i32>} : memref<128x128xf32, #tpu.memory_space<vmem>>, vector<128x128xf32>,
    } else {
    }
    return
  }
  func.func @transform_0(%arg0: i32, %arg1: i32) -> (i32, i32) {
    %c0_i32 = arith.constant 0 : i32
    return %arg0, %arg1 : i32, i32
  }
  func.func @transform_1(%arg0: i32, %arg1: i32) -> (i32, i32) {
    %c0_i32 = arith.constant 0 : i32
    %c0_i32_0 = arith.constant 0 : i32
    return %arg1, %c0_i32 : i32, i32
  }
  func.func @transform_2(%arg0: i32, %arg1: i32) -> (i32, i32) {
    %c0_i32 = arith.constant 0 : i32
    %c0_i32_0 = arith.constant 0 : i32
    %c0_i32_1 = arith.constant 0 : i32
    return %c0_i32, %c0_i32_0 : i32, i32
  }
  func.func @transform_3(%arg0: i32, %arg1: i32) -> (i32, i32) {
    %c0_i32 = arith.constant 0 : i32
    %c0_i32_0 = arith.constant 0 : i32
    return %arg0, %c0_i32 : i32, i32
  }
}

</mosaic_0001>

<llo_original>
// kernel: gnn_step.1
$region0: #{gnn_step.1}
  #allocation0 [shape = 'u32[]', space=smem, size = 0x4, offset = 0x4, fixed_abs, tag = 'smem constant byte address 0x4 - core index']
  #allocation1 [shape = 'u32[144,128]{1,0:T(1,128)}', space=vmem, size = 0x12000, scoped, tag = 'internal scratch']
  #allocation2 [shape = 'f32[128,32]{1,0:T(8,128)}', space=vmem, size = 0x10000, scoped, tag = 'scratch operand']
  %s0 = inlined_call_operand.hbm [shape: bf16[128,128], index: 0, kind: input, shape index: {}]
  %s1 = inlined_call_operand.hbm [shape: bf16[128,32], index: 1, kind: input, shape index: {}]
  %s2 = inlined_call_operand.hbm [shape: f32[32,128], index: 2, kind: input, shape index: {}]
  %s3 = inlined_call_operand.hbm [shape: f32[128,128], index: 3, kind: output, shape index: {}]
  %s4 = sld [smem:[#allocation0]]
  $region42: #{gnn_step.1} parent=0
    _
  %s6 = ssub.s32 1, %s4
  %s7 = scalar_select 0, %s6, %s4
  $region1: #{gnn_step.1} parent=0
    #allocation3 [shape = 'u8[32768]{0}', space=vmem, size = 0x8000, scoped, tag = 'input window, operand 0, single buffered']
    #allocation4 [shape = 's32[1]{0}', space=sflag, size = 0x4, scoped, tag = 'scoped memory for gnn_step.1']
    #allocation5 [shape = 's32[1]{0}', space=sflag, size = 0x4, scoped, tag = 'scoped memory for gnn_step.1']
    #allocation6 [shape = 'u8[32768]{0}', space=vmem, size = 0x8000, scoped, tag = 'input window, operand 1, single buffered']
    #allocation7 [shape = 's32[1]{0}', space=sflag, size = 0x4, scoped, tag = 'scoped memory for gnn_step.1']
    #allocation8 [shape = 'u8[16384]{0}', space=vmem, size = 0x4000, scoped, tag = 'input window, operand 2, single buffered']
    #allocation9 [shape = 'u8[65536]{0}', space=vmem, size = 0x10000, scoped, tag = 'output window, operand 0, single buffered']
    %8 = vsyncpa [#allocation4], 0
    %9 = vsyncpa [#allocation7], 0
    %10 = vsyncpa [#allocation5], 0
    // Predicated region
    $region2: #{gnn_step.1} parent=1 // pred_check
      _
    $region3: #{gnn_step.1} parent=1 // pred_check_branch
      %12 = sbr.rel (0) target = $region5
    $region4: #{gnn_step.1} parent=1 // pred_region
      %s14 = ssub.s32 1024, 1024
      %15 = vsyncadd [#allocation4], %s14
      %s16 = sshll.u32 [#allocation3], 4
      %s17 = int_to_ptr.vmem [resolvable:$true] %s16
      %22 = dma.hbm_to_vmem [thread:$0]  %s0, 1024, %s17, [#allocation4], 64, 64, 4
    $region5: #{gnn_step.1} parent=1 // pred_fallthru
      _
    // Predicated region
    $region6: #{gnn_step.1} parent=1 // pred_check
      _
    $region7: #{gnn_step.1} parent=1 // pred_check_branch
      %24 = sbr.rel (0) target = $region9
    $region8: #{gnn_step.1} parent=1 // pred_region
      %s26 = ssub.s32 1024, 1024
      %27 = vsyncadd [#allocation7], %s26
      %s28 = sshll.u32 [#allocation6], 4
      %s29 = int_to_ptr.vmem [resolvable:$true] %s28
      %34 = dma.hbm_to_vmem [thread:$0]  %s1, 1024, %s29, [#allocation7], 64, 64, 4
    $region9: #{gnn_step.1} parent=1 // pred_fallthru
      _
    // Predicated region
    $region10: #{gnn_step.1} parent=1 // pred_check
      _
    $region11: #{gnn_step.1} parent=1 // pred_check_branch
      %36 = sbr.rel (0) target = $region13
    $region12: #{gnn_step.1} parent=1 // pred_region
      %s38 = ssub.s32 512, 512
      %39 = vsyncadd [#allocation7], %s38
      %s40 = sshll.u32 [#allocation8], 4
      %s41 = int_to_ptr.vmem [resolvable:$true] %s40
      %46 = dma.hbm_to_vmem [thread:$0]  %s2, 512, %s41, [#allocation7], 128, 128, 8
    $region13: #{gnn_step.1} parent=1 // pred_fallthru
      _
    // Predicated region
    $region14: #{gnn_step.1} parent=1 // pred_check
      _
    $region15: #{gnn_step.1} parent=1 // pred_check_branch
      %48 = sbr.rel (0) target = $region17
    $region16: #{gnn_step.1} parent=1 // pred_region
      %49 = dma.done [#allocation4], 1024
    $region17: #{gnn_step.1} parent=1 // pred_fallthru
      _
    // Predicated region
    $region18: #{gnn_step.1} parent=1 // pred_check
      _
    $region19: #{gnn_step.1} parent=1 // pred_check_branch
      %51 = sbr.rel (0) target = $region21
    $region20: #{gnn_step.1} parent=1 // pred_region
      %52 = dma.done [#allocation7], 1024
    $region21: #{gnn_step.1} parent=1 // pred_fallthru
      _
    // Predicated region
    $region22: #{gnn_step.1} parent=1 // pred_check
      _
    $region23: #{gnn_step.1} parent=1 // pred_check_branch
      %54 = sbr.rel (0) target = $region25
    $region24: #{gnn_step.1} parent=1 // pred_region
      %55 = dma.done [#allocation7], 512
    $region25: #{gnn_step.1} parent=1 // pred_fallthru
      _
    %p57 = scmp.eq.s32.totalorder 0, 0
    // Predicated region
    $region26: #{gnn_step.1} parent=1 // pred_check
      %p58 = pneg %p57
    $region27: #{gnn_step.1} parent=1 // pred_check_branch
      %60 = sbr.rel (%p58) target = $region29
    $region28: #{gnn_step.1} parent=1 // pred_region
      %vm61 = vcmask 261120
      %62 = vst.msk [vmem:[#allocation2] sm:$0xff] %vm61, 0.0
      %63 = vst.msk [vmem:[#allocation2 + $0x8] sm:$0xff] %vm61, 0.0
      %64 = vst.msk [vmem:[#allocation2 + $0x10] sm:$0xff] %vm61, 0.0
      %65 = vst.msk [vmem:[#allocation2 + $0x18] sm:$0xff] %vm61, 0.0
      %66 = vst.msk [vmem:[#allocation2 + $0x20] sm:$0xff] %vm61, 0.0
      %67 = vst.msk [vmem:[#allocation2 + $0x28] sm:$0xff] %vm61, 0.0
      %68 = vst.msk [vmem:[#allocation2 + $0x30] sm:$0xff] %vm61, 0.0
      %69 = vst.msk [vmem:[#allocation2 + $0x38] sm:$0xff] %vm61, 0.0
      %70 = vst.msk [vmem:[#allocation2 + $0x40] sm:$0xff] %vm61, 0.0
      %71 = vst.msk [vmem:[#allocation2 + $0x48] sm:$0xff] %vm61, 0.0
      %72 = vst.msk [vmem:[#allocation2 + $0x50] sm:$0xff] %vm61, 0.0
      %73 = vst.msk [vmem:[#allocation2 + $0x58] sm:$0xff] %vm61, 0.0
      %74 = vst.msk [vmem:[#allocation2 + $0x60] sm:$0xff] %vm61, 0.0
      %75 = vst.msk [vmem:[#allocation2 + $0x68] sm:$0xff] %vm61, 0.0
      %76 = vst.msk [vmem:[#allocation2 + $0x70] sm:$0xff] %vm61, 0.0
      %77 = vst.msk [vmem:[#allocation2 + $0x78] sm:$0xff] %vm61, 0.0
    $region29: #{gnn_step.1} parent=1 // pred_fallthru
      _
    %v78 = vld [vmem:[#allocation2] sm:$0xff]
    %v79 = vld [vmem:[#allocation2 + $0x8] sm:$0xff]
    %v80 = vld [vmem:[#allocation2 + $0x10] sm:$0xff]
    %v81 = vld [vmem:[#allocation2 + $0x18] sm:$0xff]
    %v82 = vld [vmem:[#allocation2 + $0x20] sm:$0xff]
    %v83 = vld [vmem:[#allocation2 + $0x28] sm:$0xff]
    %v84 = vld [vmem:[#allocation2 + $0x30] sm:$0xff]
    %v85 = vld [vmem:[#allocation2 + $0x38] sm:$0xff]
    %v86 = vld [vmem:[#allocation2 + $0x40] sm:$0xff]
    %v87 = vld [vmem:[#allocation2 + $0x48] sm:$0xff]
    %v88 = vld [vmem:[#allocation2 + $0x50] sm:$0xff]
    %v89 = vld [vmem:[#allocation2 + $0x58] sm:$0xff]
    %v90 = vld [vmem:[#allocation2 + $0x60] sm:$0xff]
    %v91 = vld [vmem:[#allocation2 + $0x68] sm:$0xff]
    %v92 = vld [vmem:[#allocation2 + $0x70] sm:$0xff]
    %v93 = vld [vmem:[#allocation2 + $0x78] sm:$0xff]
    %v94 = vld [vmem:[#allocation3] sm:$0xf]
    %v95 = vld [vmem:[#allocation3 + $0x4] sm:$0xf]
    %v96 = vld [vmem:[#allocation3 + $0x8] sm:$0xf]
    %v97 = vld [vmem:[#allocation3 + $0xc] sm:$0xf]
    %v98 = vld [vmem:[#allocation3 + $0x10] sm:$0xf]
    %v99 = vld [vmem:[#allocation3 + $0x14] sm:$0xf]
    %v100 = vld [vmem:[#allocation3 + $0x18] sm:$0xf]
    %v101 = vld [vmem:[#allocation3 + $0x1c] sm:$0xf]
    %v102 = vld [vmem:[#allocation3 + $0x20] sm:$0xf]
    %v103 = vld [vmem:[#allocation3 + $0x24] sm:$0xf]
    %v104 = vld [vmem:[#allocation3 + $0x28] sm:$0xf]
    %v105 = vld [vmem:[#allocation3 + $0x2c] sm:$0xf]
    %v106 = vld [vmem:[#allocation3 + $0x30] sm:$0xf]
    %v107 = vld [vmem:[#allocation3 + $0x34] sm:$0xf]
    %v108 = vld [vmem:[#allocation3 + $0x38] sm:$0xf]
    %v109 = vld [vmem:[#allocation3 + $0x3c] sm:$0xf]
    %v110 = vld [vmem:[#allocation6] sm:$0xf]
    %v111 = vld [vmem:[#allocation6 + $0x4] sm:$0xf]
    %v112 = vld [vmem:[#allocation6 + $0x8] sm:$0xf]
    %v113 = vld [vmem:[#allocation6 + $0xc] sm:$0xf]
    %v114 = vld [vmem:[#allocation6 + $0x10] sm:$0xf]
    %v115 = vld [vmem:[#allocation6 + $0x14] sm:$0xf]
    %v116 = vld [vmem:[#allocation6 + $0x18] sm:$0xf]
    %v117 = vld [vmem:[#allocation6 + $0x1c] sm:$0xf]
    %v118 = vld [vmem:[#allocation6 + $0x20] sm:$0xf]
    %v119 = vld [vmem:[#allocation6 + $0x24] sm:$0xf]
    %v120 = vld [vmem:[#allocation6 + $0x28] sm:$0xf]
    %v121 = vld [vmem:[#allocation6 + $0x2c] sm:$0xf]
    %v122 = vld [vmem:[#allocation6 + $0x30] sm:$0xf]
    %v123 = vld [vmem:[#allocation6 + $0x34] sm:$0xf]
    %v124 = vld [vmem:[#allocation6 + $0x38] sm:$0xf]
    %v125 = vld [vmem:[#allocation6 + $0x3c] sm:$0xf]
    %v142 = vunpack.c.l.b16 %v94
    %v143 = vunpack.c.l.b16 %v95
    %v144 = vunpack.c.l.b16 %v96
    %v145 = vunpack.c.l.b16 %v97
    %v146 = vunpack.c.l.b16 %v98
    %v147 = vunpack.c.l.b16 %v99
    %v148 = vunpack.c.l.b16 %v100
    %v149 = vunpack.c.l.b16 %v101
    %v150 = vunpack.c.l.b16 %v102
    %v151 = vunpack.c.l.b16 %v103
    %v152 = vunpack.c.l.b16 %v104
    %v153 = vunpack.c.l.b16 %v105
    %v154 = vunpack.c.l.b16 %v106
    %v155 = vunpack.c.l.b16 %v107
    %v156 = vunpack.c.l.b16 %v108
    %v157 = vunpack.c.l.b16 %v109
    %v158 = vpack.c.b16 %v143, %v142
    %v159 = vpack.c.b16 %v145, %v144
    %v160 = vpack.c.b16 %v147, %v146
    %v161 = vpack.c.b16 %v149, %v148
    %v162 = vpack.c.b16 %v151, %v150
    %v163 = vpack.c.b16 %v153, %v152
    %v164 = vpack.c.b16 %v155, %v154
    %v165 = vpack.c.b16 %v157, %v156
    %v190 = vunpack.c.l.b16 %v110
    %v191 = vunpack.c.l.b16 %v111
    %v192 = vunpack.c.l.b16 %v112
    %v193 = vunpack.c.l.b16 %v113
    %v194 = vunpack.c.l.b16 %v114
    %v195 = vunpack.c.l.b16 %v115
    %v196 = vunpack.c.l.b16 %v116
    %v197 = vunpack.c.l.b16 %v117
    %v198 = vunpack.c.l.b16 %v118
    %v199 = vunpack.c.l.b16 %v119
    %v200 = vunpack.c.l.b16 %v120
    %v201 = vunpack.c.l.b16 %v121
    %v202 = vunpack.c.l.b16 %v122
    %v203 = vunpack.c.l.b16 %v123
    %v204 = vunpack.c.l.b16 %v124
    %v205 = vunpack.c.l.b16 %v125
    %v206 = vpack.c.b16 %v191, %v190
    %v207 = vpack.c.b16 %v193, %v192
    %v208 = vpack.c.b16 %v195, %v194
    %v209 = vpack.c.b16 %v197, %v196
    %v210 = vpack.c.b16 %v199, %v198
    %v211 = vpack.c.b16 %v201, %v200
    %v212 = vpack.c.b16 %v203, %v202
    %v213 = vpack.c.b16 %v205, %v204
    %222 = vmatprep.subr.bf16.mxu0 0
    %223 = vmatpush1.bf16.msra.mxu0 %v206
    %224 = vmatprep.subr.bf16.mxu0 0
    %225 = vmatpush1.bf16.msra.mxu0 %v207
    %226 = vmatprep.subr.bf16.mxu0 0
    %227 = vmatpush1.bf16.msra.mxu0 %v208
    %228 = vmatprep.subr.bf16.mxu0 0
    %229 = vmatpush1.bf16.msra.mxu0 %v209
    %230 = vmatprep.subr.bf16.mxu0 0
    %231 = vmatpush1.bf16.msra.mxu0 %v210
    %232 = vmatprep.subr.bf16.mxu0 0
    %233 = vmatpush1.bf16.msra.mxu0 %v211
    %234 = vmatprep.subr.bf16.mxu0 0
    %235 = vmatpush1.bf16.msra.mxu0 %v212
    %236 = vmatprep.subr.bf16.mxu0 0
    %237 = vmatpush1.bf16.msra.mxu0 %v213
    %238 = vmatprep.subr.bf16.mxu0 0
    %239 = vmatpush1.bf16.msra.mxu0 0
    %240 = vmatprep.subr.bf16.mxu0 0
    %241 = vmatpush1.bf16.msra.mxu0 0
    %242 = vmatprep.subr.bf16.mxu0 0
    %243 = vmatpush1.bf16.msra.mxu0 0
    %244 = vmatprep.subr.bf16.mxu0 0
    %245 = vmatpush1.bf16.msra.mxu0 0
    %246 = vmatprep.subr.bf16.mxu0 0
    %247 = vmatpush1.bf16.msra.mxu0 0
    %248 = vmatprep.subr.bf16.mxu0 0
    %249 = vmatpush1.bf16.msra.mxu0 0
    %250 = vmatprep.subr.bf16.mxu0 0
    %251 = vmatpush1.bf16.msra.mxu0 0
    %252 = vmatprep.subr.bf16.mxu0 0
    %253 = vmatpush1.bf16.msra.mxu0 0
    %254 = vmatprep.mubr.bf16.mxu0 0
    %255 = vmatmul.mubr.bf16.gmra.mrb[0].mxu0 %v158
    %v256 = vpop.f32.mrb[0].mxu0
    %v257 = vadd.f32 0.0, %v256
    %v258 = vpop.f32.mrb[0].mxu0
    %v259 = vpop.f32.mrb[0].mxu0
    %v260 = vadd.f32 0.0, %v259
    %v261 = vpop.f32.mrb[0].mxu0
    %262 = vmatprep.mubr.bf16.mxu0 0
    %263 = vmatmul.mubr.bf16.gmra.mrb[0].mxu0 %v159
    %v264 = vpop.f32.mrb[0].mxu0
    %v265 = vadd.f32 0.0, %v264
    %v266 = vpop.f32.mrb[0].mxu0
    %v267 = vpop.f32.mrb[0].mxu0
    %v268 = vadd.f32 0.0, %v267
    %v269 = vpop.f32.mrb[0].mxu0
    %270 = vmatprep.mubr.bf16.mxu0 0
    %271 = vmatmul.mubr.bf16.gmra.mrb[0].mxu0 %v160
    %v272 = vpop.f32.mrb[0].mxu0
    %v273 = vadd.f32 0.0, %v272
    %v274 = vpop.f32.mrb[0].mxu0
    %v275 = vpop.f32.mrb[0].mxu0
    %v276 = vadd.f32 0.0, %v275
    %v277 = vpop.f32.mrb[0].mxu0
    %278 = vmatprep.mubr.bf16.mxu0 0
    %279 = vmatmul.mubr.bf16.gmra.mrb[0].mxu0 %v161
    %v280 = vpop.f32.mrb[0].mxu0
    %v281 = vadd.f32 0.0, %v280
    %v282 = vpop.f32.mrb[0].mxu0
    %v283 = vpop.f32.mrb[0].mxu0
    %v284 = vadd.f32 0.0, %v283
    %v285 = vpop.f32.mrb[0].mxu0
    %286 = vmatprep.mubr.bf16.mxu0 0
    %287 = vmatmul.mubr.bf16.gmra.mrb[0].mxu0 %v162
    %v288 = vpop.f32.mrb[0].mxu0
    %v289 = vadd.f32 0.0, %v288
    %v290 = vpop.f32.mrb[0].mxu0
    %v291 = vpop.f32.mrb[0].mxu0
    %v292 = vadd.f32 0.0, %v291
    %v293 = vpop.f32.mrb[0].mxu0
    %294 = vmatprep.mubr.bf16.mxu0 0
    %295 = vmatmul.mubr.bf16.gmra.mrb[0].mxu0 %v163
    %v296 = vpop.f32.mrb[0].mxu0
    %v297 = vadd.f32 0.0, %v296
    %v298 = vpop.f32.mrb[0].mxu0
    %v299 = vpop.f32.mrb[0].mxu0
    %v300 = vadd.f32 0.0, %v299
    %v301 = vpop.f32.mrb[0].mxu0
    %302 = vmatprep.mubr.bf16.mxu0 0
    %303 = vmatmul.mubr.bf16.gmra.mrb[0].mxu0 %v164
    %v304 = vpop.f32.mrb[0].mxu0
    %v305 = vadd.f32 0.0, %v304
    %v306 = vpop.f32.mrb[0].mxu0
    %v307 = vpop.f32.mrb[0].mxu0
    %v308 = vadd.f32 0.0, %v307
    %v309 = vpop.f32.mrb[0].mxu0
    %310 = vmatprep.mubr.bf16.mxu0 0
    %311 = vmatmul.mubr.bf16.gmra.mrb[0].mxu0 %v165
    %v312 = vpop.f32.mrb[0].mxu0
    %v313 = vadd.f32 0.0, %v312
    %v314 = vpop.f32.mrb[0].mxu0
    %v315 = vpop.f32.mrb[0].mxu0
    %v316 = vadd.f32 0.0, %v315
    %v317 = vpop.f32.mrb[0].mxu0
    %318 = vdwg.mxu0
    %v319 = vadd.f32 %v78, %v257
    %v320 = vadd.f32 %v79, %v260
    %v321 = vadd.f32 %v80, %v265
    %v322 = vadd.f32 %v81, %v268
    %v323 = vadd.f32 %v82, %v273
    %v324 = vadd.f32 %v83, %v276
    %v325 = vadd.f32 %v84, %v281
    %v326 = vadd.f32 %v85, %v284
    %v327 = vadd.f32 %v86, %v289
    %v328 = vadd.f32 %v87, %v292
    %v329 = vadd.f32 %v88, %v297
    %v330 = vadd.f32 %v89, %v300
    %v331 = vadd.f32 %v90, %v305
    %v332 = vadd.f32 %v91, %v308
    %v333 = vadd.f32 %v92, %v313
    %v334 = vadd.f32 %v93, %v316
    %vm335 = vcmask 261120
    %336 = vst.msk [vmem:[#allocation2] sm:$0xff] %vm335, %v319
    %337 = vst.msk [vmem:[#allocation2 + $0x8] sm:$0xff] %vm335, %v320
    %338 = vst.msk [vmem:[#allocation2 + $0x10] sm:$0xff] %vm335, %v321
    %339 = vst.msk [vmem:[#allocation2 + $0x18] sm:$0xff] %vm335, %v322
    %340 = vst.msk [vmem:[#allocation2 + $0x20] sm:$0xff] %vm335, %v323
    %341 = vst.msk [vmem:[#allocation2 + $0x28] sm:$0xff] %vm335, %v324
    %342 = vst.msk [vmem:[#allocation2 + $0x30] sm:$0xff] %vm335, %v325
    %343 = vst.msk [vmem:[#allocation2 + $0x38] sm:$0xff] %vm335, %v326
    %344 = vst.msk [vmem:[#allocation2 + $0x40] sm:$0xff] %vm335, %v327
    %345 = vst.msk [vmem:[#allocation2 + $0x48] sm:$0xff] %vm335, %v328
    %346 = vst.msk [vmem:[#allocation2 + $0x50] sm:$0xff] %vm335, %v329
    %347 = vst.msk [vmem:[#allocation2 + $0x58] sm:$0xff] %vm335, %v330
    %348 = vst.msk [vmem:[#allocation2 + $0x60] sm:$0xff] %vm335, %v331
    %349 = vst.msk [vmem:[#allocation2 + $0x68] sm:$0xff] %vm335, %v332
    %350 = vst.msk [vmem:[#allocation2 + $0x70] sm:$0xff] %vm335, %v333
    %351 = vst.msk [vmem:[#allocation2 + $0x78] sm:$0xff] %vm335, %v334
    // Predicated region
    $region30: #{gnn_step.1} parent=1 // pred_check
      %p352 = pneg %p57
    $region31: #{gnn_step.1} parent=1 // pred_check_branch
      %354 = sbr.rel (%p352) target = $region33
    $region32: #{gnn_step.1} parent=1 // pred_region
      %v355 = vld [vmem:[#allocation2] sm:$0xff]
      %v356 = vld [vmem:[#allocation2 + $0x8] sm:$0xff]
      %v357 = vld [vmem:[#allocation2 + $0x10] sm:$0xff]
      %v358 = vld [vmem:[#allocation2 + $0x18] sm:$0xff]
      %v359 = vld [vmem:[#allocation2 + $0x20] sm:$0xff]
      %v360 = vld [vmem:[#allocation2 + $0x28] sm:$0xff]
      %v361 = vld [vmem:[#allocation2 + $0x30] sm:$0xff]
      %v362 = vld [vmem:[#allocation2 + $0x38] sm:$0xff]
      %v363 = vld [vmem:[#allocation2 + $0x40] sm:$0xff]
      %v364 = vld [vmem:[#allocation2 + $0x48] sm:$0xff]
      %v365 = vld [vmem:[#allocation2 + $0x50] sm:$0xff]
      %v366 = vld [vmem:[#allocation2 + $0x58] sm:$0xff]
      %v367 = vld [vmem:[#allocation2 + $0x60] sm:$0xff]
      %v368 = vld [vmem:[#allocation2 + $0x68] sm:$0xff]
      %v369 = vld [vmem:[#allocation2 + $0x70] sm:$0xff]
      %v370 = vld [vmem:[#allocation2 + $0x78] sm:$0xff]
      %v371 = vld [vmem:[#allocation8] sm:$0xff]
      %v372 = vld [vmem:[#allocation8 + $0x8] sm:$0xff]
      %v373 = vld [vmem:[#allocation8 + $0x10] sm:$0xff]
      %v374 = vld [vmem:[#allocation8 + $0x18] sm:$0xff]
      %v376 = vsel %vm335, %v355, 0
      %v379 = vsel %vm335, %v356, 0
      %v382 = vsel %vm335, %v357, 0
      %v385 = vsel %vm335, %v358, 0
      %v388 = vsel %vm335, %v359, 0
      %v391 = vsel %vm335, %v360, 0
      %v394 = vsel %vm335, %v361, 0
      %v397 = vsel %vm335, %v362, 0
      %v400 = vsel %vm335, %v363, 0
      %v403 = vsel %vm335, %v364, 0
      %v406 = vsel %vm335, %v365, 0
      %v409 = vsel %vm335, %v366, 0
      %v412 = vsel %vm335, %v367, 0
      %v415 = vsel %vm335, %v368, 0
      %v418 = vsel %vm335, %v369, 0
      %v421 = vsel %vm335, %v370, 0
      %423 = vmatprep.subr.mxu0 0.0
      %424 = vmatpush1.msra.mxu0 %v371
      %425 = vmatprep.subr.mxu0 0.0
      %426 = vmatpush1.msra.mxu0 %v372
      %427 = vmatprep.subr.mxu0 0.0
      %428 = vmatpush1.msra.mxu0 %v373
      %429 = vmatprep.subr.mxu0 0.0
      %430 = vmatpush1.msra.mxu0 %v374
      %431 = vmatprep.subr.mxu0 0.0
      %432 = vmatpush1.msra.mxu0 0.0
      %433 = vmatprep.subr.mxu0 0.0
      %434 = vmatpush1.msra.mxu0 0.0
      %435 = vmatprep.subr.mxu0 0.0
      %436 = vmatpush1.msra.mxu0 0.0
      %437 = vmatprep.subr.mxu0 0.0
      %438 = vmatpush1.msra.mxu0 0.0
      %439 = vmatprep.subr.mxu0 0.0
      %440 = vmatpush1.msra.mxu0 0.0
      %441 = vmatprep.subr.mxu0 0.0
      %442 = vmatpush1.msra.mxu0 0.0
      %443 = vmatprep.subr.mxu0 0.0
      %444 = vmatpush1.msra.mxu0 0.0
      %445 = vmatprep.subr.mxu0 0.0
      %446 = vmatpush1.msra.mxu0 0.0
      %447 = vmatprep.subr.mxu0 0.0
      %448 = vmatpush1.msra.mxu0 0.0
      %449 = vmatprep.subr.mxu0 0.0
      %450 = vmatpush1.msra.mxu0 0.0
      %451 = vmatprep.subr.mxu0 0.0
      %452 = vmatpush1.msra.mxu0 0.0
      %453 = vmatprep.subr.mxu0 0.0
      %454 = vmatpush1.msra.mxu0 0.0
      %455 = vmatprep.subr.mxu0 0.0
      %456 = vmatpush1.msra.mxu0 0.0
      %457 = vmatprep.subr.mxu0 0.0
      %458 = vmatpush1.msra.mxu0 0.0
      %459 = vmatprep.subr.mxu0 0.0
      %460 = vmatpush1.msra.mxu0 0.0
      %461 = vmatprep.subr.mxu0 0.0
      %462 = vmatpush1.msra.mxu0 0.0
      %463 = vmatprep.subr.mxu0 0.0
      %464 = vmatpush1.msra.mxu0 0.0
      %465 = vmatprep.subr.mxu0 0.0
      %466 = vmatpush1.msra.mxu0 0.0
      %467 = vmatprep.subr.mxu0 0.0
      %468 = vmatpush1.msra.mxu0 0.0
      %469 = vmatprep.subr.mxu0 0.0
      %470 = vmatpush1.msra.mxu0 0.0
      %471 = vmatprep.subr.mxu0 0.0
      %472 = vmatpush1.msra.mxu0 0.0
      %473 = vmatprep.subr.mxu0 0.0
      %474 = vmatpush1.msra.mxu0 0.0
      %475 = vmatprep.subr.mxu0 0.0
      %476 = vmatpush1.msra.mxu0 0.0
      %477 = vmatprep.subr.mxu0 0.0
      %478 = vmatpush1.msra.mxu0 0.0
      %479 = vmatprep.subr.mxu0 0.0
      %480 = vmatpush1.msra.mxu0 0.0
      %481 = vmatprep.subr.mxu0 0.0
      %482 = vmatpush1.msra.mxu0 0.0
      %483 = vmatprep.subr.mxu0 0.0
      %484 = vmatpush1.msra.mxu0 0.0
      %485 = vmatprep.subr.mxu0 0.0
      %486 = vmatpush1.msra.mxu0 0.0
      %487 = vmatprep.mubr.f32.mxu0 0.0
      %488 = vmatmul.mubr.f32.gmra.mrb[0].mxu0 %v376
      %v489 = vpop.f32.mrb[0].mxu0
      %v490 = vadd.f32 0.0, %v489
      %v491 = vpop.f32.mrb[0].mxu0
      %492 = vmatprep.mubr.f32.mxu0 0.0
      %493 = vmatmul.mubr.f32.gmra.mrb[0].mxu0 %v379
      %v494 = vpop.f32.mrb[0].mxu0
      %v495 = vadd.f32 0.0, %v494
      %v496 = vpop.f32.mrb[0].mxu0
      %497 = vmatprep.mubr.f32.mxu0 0.0
      %498 = vmatmul.mubr.f32.gmra.mrb[0].mxu0 %v382
      %v499 = vpop.f32.mrb[0].mxu0
      %v500 = vadd.f32 0.0, %v499
      %v501 = vpop.f32.mrb[0].mxu0
      %502 = vmatprep.mubr.f32.mxu0 0.0
      %503 = vmatmul.mubr.f32.gmra.mrb[0].mxu0 %v385
      %v504 = vpop.f32.mrb[0].mxu0
      %v505 = vadd.f32 0.0, %v504
      %v506 = vpop.f32.mrb[0].mxu0
      %507 = vmatprep.mubr.f32.mxu0 0.0
      %508 = vmatmul.mubr.f32.gmra.mrb[0].mxu0 %v388
      %v509 = vpop.f32.mrb[0].mxu0
      %v510 = vadd.f32 0.0, %v509
      %v511 = vpop.f32.mrb[0].mxu0
      %512 = vmatprep.mubr.f32.mxu0 0.0
      %513 = vmatmul.mubr.f32.gmra.mrb[0].mxu0 %v391
      %v514 = vpop.f32.mrb[0].mxu0
      %v515 = vadd.f32 0.0, %v514
      %v516 = vpop.f32.mrb[0].mxu0
      %517 = vmatprep.mubr.f32.mxu0 0.0
      %518 = vmatmul.mubr.f32.gmra.mrb[0].mxu0 %v394
      %v519 = vpop.f32.mrb[0].mxu0
      %v520 = vadd.f32 0.0, %v519
      %v521 = vpop.f32.mrb[0].mxu0
      %522 = vmatprep.mubr.f32.mxu0 0.0
      %523 = vmatmul.mubr.f32.gmra.mrb[0].mxu0 %v397
      %v524 = vpop.f32.mrb[0].mxu0
      %v525 = vadd.f32 0.0, %v524
      %v526 = vpop.f32.mrb[0].mxu0
      %527 = vmatprep.mubr.f32.mxu0 0.0
      %528 = vmatmul.mubr.f32.gmra.mrb[0].mxu0 %v400
      %v529 = vpop.f32.mrb[0].mxu0
      %v530 = vadd.f32 0.0, %v529
      %v531 = vpop.f32.mrb[0].mxu0
      %532 = vmatprep.mubr.f32.mxu0 0.0
      %533 = vmatmul.mubr.f32.gmra.mrb[0].mxu0 %v403
      %v534 = vpop.f32.mrb[0].mxu0
      %v535 = vadd.f32 0.0, %v534
      %v536 = vpop.f32.mrb[0].mxu0
      %537 = vmatprep.mubr.f32.mxu0 0.0
      %538 = vmatmul.mubr.f32.gmra.mrb[0].mxu0 %v406
      %v539 = vpop.f32.mrb[0].mxu0
      %v540 = vadd.f32 0.0, %v539
      %v541 = vpop.f32.mrb[0].mxu0
      %542 = vmatprep.mubr.f32.mxu0 0.0
      %543 = vmatmul.mubr.f32.gmra.mrb[0].mxu0 %v409
      %v544 = vpop.f32.mrb[0].mxu0
      %v545 = vadd.f32 0.0, %v544
      %v546 = vpop.f32.mrb[0].mxu0
      %547 = vmatprep.mubr.f32.mxu0 0.0
      %548 = vmatmul.mubr.f32.gmra.mrb[0].mxu0 %v412
      %v549 = vpop.f32.mrb[0].mxu0
      %v550 = vadd.f32 0.0, %v549
      %v551 = vpop.f32.mrb[0].mxu0
      %552 = vmatprep.mubr.f32.mxu0 0.0
      %553 = vmatmul.mubr.f32.gmra.mrb[0].mxu0 %v415
      %v554 = vpop.f32.mrb[0].mxu0
      %v555 = vadd.f32 0.0, %v554
      %v556 = vpop.f32.mrb[0].mxu0
      %557 = vmatprep.mubr.f32.mxu0 0.0
      %558 = vmatmul.mubr.f32.gmra.mrb[0].mxu0 %v418
      %v559 = vpop.f32.mrb[0].mxu0
      %v560 = vadd.f32 0.0, %v559
      %v561 = vpop.f32.mrb[0].mxu0
      %562 = vmatprep.mubr.f32.mxu0 0.0
      %563 = vmatmul.mubr.f32.gmra.mrb[0].mxu0 %v421
      %v564 = vpop.f32.mrb[0].mxu0
      %v565 = vadd.f32 0.0, %v564
      %v566 = vpop.f32.mrb[0].mxu0
      %567 = vdwg.mxu0
      %568 = vst [vmem:[#allocation9] sm:$0xff] %v490
      %569 = vst [vmem:[#allocation9 + $0x8] sm:$0xff] %v495
      %570 = vst [vmem:[#allocation9 + $0x10] sm:$0xff] %v500
      %571 = vst [vmem:[#allocation9 + $0x18] sm:$0xff] %v505
      %572 = vst [vmem:[#allocation9 + $0x20] sm:$0xff] %v510
      %573 = vst [vmem:[#allocation9 + $0x28] sm:$0xff] %v515
      %574 = vst [vmem:[#allocation9 + $0x30] sm:$0xff] %v520
      %575 = vst [vmem:[#allocation9 + $0x38] sm:$0xff] %v525
      %576 = vst [vmem:[#allocation9 + $0x40] sm:$0xff] %v530
      %577 = vst [vmem:[#allocation9 + $0x48] sm:$0xff] %v535
      %578 = vst [vmem:[#allocation9 + $0x50] sm:$0xff] %v540
      %579 = vst [vmem:[#allocation9 + $0x58] sm:$0xff] %v545
      %580 = vst [vmem:[#allocation9 + $0x60] sm:$0xff] %v550
      %581 = vst [vmem:[#allocation9 + $0x68] sm:$0xff] %v555
      %582 = vst [vmem:[#allocation9 + $0x70] sm:$0xff] %v560
      %583 = vst [vmem:[#allocation9 + $0x78] sm:$0xff] %v565
    $region33: #{gnn_step.1} parent=1 // pred_fallthru
      _
    // Predicated region
    $region34: #{gnn_step.1} parent=1 // pred_check
      _
    $region35: #{gnn_step.1} parent=1 // pred_check_branch
      %585 = sbr.rel (0) target = $region37
    $region36: #{gnn_step.1} parent=1 // pred_region
      %s587 = ssub.s32 2048, 2048
      %588 = vsyncadd [#allocation5], %s587
      %s589 = sshll.u32 [#allocation9], 4
      %s590 = int_to_ptr.vmem [resolvable:$true] %s589
      %595 = dma.vmem_to_hbm [thread:$0]  %s590, 2048, %s3, [#allocation5], 128, 128, 8
    $region37: #{gnn_step.1} parent=1 // pred_fallthru
      _
    // Predicated region
    $region38: #{gnn_step.1} parent=1 // pred_check
      _
    $region39: #{gnn_step.1} parent=1 // pred_check_branch
      %597 = sbr.rel (0) target = $region41
    $region40: #{gnn_step.1} parent=1 // pred_region
      %598 = dma.done [#allocation5], 2048
    $region41: #{gnn_step.1} parent=1 // pred_fallthru
      _
    %599 = vsyncpa [#allocation4], 1
    %600 = vsyncpa [#allocation7], 1
    %601 = vsyncpa [#allocation5], 1

</llo_original>
